<compile_context>
chip_gen: v7x
topology: tpu7x:2x2x1
jax: 0.10.0
libtpu: 0.0.40
codegen_flags: <defaults>
</compile_context>

<pallas_src>
import functools

import jax
import jax.numpy as jnp
from jax.experimental import pallas as pl
from jax.experimental.pallas import tpu as pltpu


def _upsample_mxu_kernel(x_ref, w_ref, b_ref, o_ref, *, valid_t, t_tile):
    # x_ref: (R, Tk) VMEM   w_ref: (Tk, Tk*U) VMEM (block-diag interleave)
    # b_ref: (1,)   SMEM    o_ref: (R, Tk*U) VMEM (lane-dense output tile)
    x = x_ref[...].astype(jnp.float32)
    if valid_t % t_tile != 0:
        # Zero the out-of-range T columns of the last tile so garbage padding
        # cannot leak (e.g. NaN * 0) into valid output columns through the dot.
        col = (jax.lax.broadcasted_iota(jnp.int32, x.shape, 1)
               + pl.program_id(1) * t_tile)
        x = jnp.where(col < valid_t, x, 0.0)
    out = jnp.dot(x, w_ref[...], preferred_element_type=jnp.float32) + b_ref[0]
    o_ref[...] = out.astype(o_ref.dtype)


def upsampling_forward(x, weight, bias, upsampling_factor, *,
                       row_tile=256, t_tile=128):
    """Pallas equivalent of UpSampling.forward.

    x:      (B, C, T)
    weight: ConvTranspose2d weight of shape (1, 1, 1, U)
    bias:   shape (1,)
    returns (B, C, T * U)
    """
    B, C, T = x.shape
    U = int(upsampling_factor)
    BC = B * C

    x2 = x.reshape(BC, T)
    w = weight.reshape(U).astype(jnp.float32)
    b = bias.reshape(1).astype(jnp.float32)

    # Tile sizes.  Tk is either 128-aligned or the full T; R is 8-aligned or
    # the full BC, so block shapes always satisfy the (8, 128) constraint.
    R = min(row_tile, BC)
    Tk = min(t_tile, T)

    # Block-diagonal interleave matrix: W_int[t, t*U + u] = w[u].
    # x_tile @ W_int computes the interleaved output tile on the otherwise-idle
    # MXU, replacing the broadcast + cross-lane reshape of the naive version.
    w_int = (jnp.eye(Tk, dtype=jnp.float32)[:, :, None]
             * w[None, None, :]).reshape(Tk, Tk * U)

    grid = (pl.cdiv(BC, R), pl.cdiv(T, Tk))

    # VMEM budget: double-buffered x/out tiles + resident W_int, plus headroom.
    # Kept well under v7x's 64 MiB physical VMEM.
    est = 4 * (2 * R * Tk + 2 * R * Tk * U + 2 * Tk * Tk * U) + (1 << 20)
    vmem_bytes = int(min(max(est, 32 * 1024 * 1024), 96 * 1024 * 1024))

    kernel = functools.partial(_upsample_mxu_kernel, valid_t=T, t_tile=Tk)

    out = pl.pallas_call(
        kernel,
        out_shape=jax.ShapeDtypeStruct((BC, T * U), x.dtype),
        grid_spec=pl.GridSpec(
            grid=grid,
            in_specs=[
                pl.BlockSpec((R, Tk), lambda i, j: (i, j)),
                pl.BlockSpec((Tk, Tk * U), lambda i, j: (0, 0)),
                pl.BlockSpec(memory_space=pltpu.MemorySpace.SMEM),
            ],
            out_specs=pl.BlockSpec((R, Tk * U), lambda i, j: (i, j)),
        ),
        compiler_params=pltpu.CompilerParams(
            dimension_semantics=("parallel", "parallel"),
            vmem_limit_bytes=vmem_bytes,
        ),
    )(x2, w_int, b)
    return out.reshape(B, C, T * U)


def upsampling_reference(x, weight, bias, upsampling_factor):
    """Pure-JAX reference for ConvTranspose2d(1,1,(1,U),stride=(1,U))."""
    B, C, T = x.shape
    U = int(upsampling_factor)
    w = weight.reshape(U)
    out = x[..., None] * w[None, None, None, :] + bias.reshape(())
    return out.reshape(B, C, T * U)


if __name__ == "__main__":
    key = jax.random.PRNGKey(0)

    # --- Test 1: small shapes consistent with the module (B, C, T) ---
    B, C, T = 2, 4, 16
    U = 4
    kx, kw, kb, key = jax.random.split(key, 4)
    x = jax.random.normal(kx, (B, C, T), dtype=jnp.float32)
    bound = 1.0 / (U ** 0.5)
    weight = jax.random.uniform(kw, (1, 1, 1, U), jnp.float32, -bound, bound)
    bias = jax.random.uniform(kb, (1,), jnp.float32, -bound, bound)

    y = jax.block_until_ready(upsampling_forward(x, weight, bias, U))
    y_ref = upsampling_reference(x, weight, bias, U)
    assert y.shape == (B, C, T * U), y.shape
    assert jnp.allclose(y, y_ref, atol=1e-5, rtol=1e-5), "mismatch vs reference"

    # --- Test 2: non-divisible T / multi-step grid (exercises masking path) ---
    B2, C2, T2, U2 = 3, 5, 300, 5
    kx2, kw2, kb2, key = jax.random.split(key, 4)
    x2 = jax.random.normal(kx2, (B2, C2, T2), dtype=jnp.float32)
    bound2 = 1.0 / (U2 ** 0.5)
    weight2 = jax.random.uniform(kw2, (1, 1, 1, U2), jnp.float32, -bound2, bound2)
    bias2 = jax.random.uniform(kb2, (1,), jnp.float32, -bound2, bound2)

    y2 = jax.block_until_ready(upsampling_forward(x2, weight2, bias2, U2))
    y2_ref = upsampling_reference(x2, weight2, bias2, U2)
    assert y2.shape == (B2, C2, T2 * U2), y2.shape
    assert jnp.allclose(y2, y2_ref, atol=1e-4, rtol=1e-4), "mismatch (tiled case)"

    print("KERNEL_OK")
</pallas_src>

<mosaic_0001>
module attributes {stable_mosaic.version = 11 : i64} {
  func.func @_upsample_mxu_kernel(%arg0: i32, %arg1: i32, %arg2: memref<8x16xf32, #tpu.memory_space<vmem>>, %arg3: memref<16x64xf32, #tpu.memory_space<vmem>>, %arg4: memref<1xf32, #tpu.memory_space<smem>>, %arg5: memref<8x64xf32, #tpu.memory_space<vmem>>) attributes {dimension_semantics = [#tpu.dimension_semantics<parallel>, #tpu.dimension_semantics<parallel>], iteration_bounds = array<i64: 1, 1>, scalar_prefetch = 0 : i64, scratch_operands = 0 : i64, tpu.core_type = #tpu.core_type<tc>, window_params = [{transform_indices = @transform_0, window_bounds = array<i64: 8, 16>}, {pipeline_mode = #tpu.pipeline_mode<synchronous>, transform_indices = @transform_1, window_bounds = array<i64: 16, 64>}, {transform_indices = @transform_2, window_bounds = array<i64: 1>}, {transform_indices = @transform_3, window_bounds = array<i64: 8, 64>}]} {
    %c0 = arith.constant 0 : index
    %c0_0 = arith.constant 0 : index
    %0 = vector.load %arg2[%c0, %c0_0] : memref<8x16xf32, #tpu.memory_space<vmem>>, vector<8x16xf32>
    %c0_1 = arith.constant 0 : index
    %c0_2 = arith.constant 0 : index
    %1 = vector.load %arg3[%c0_1, %c0_2] : memref<16x64xf32, #tpu.memory_space<vmem>>, vector<16x64xf32>
    %cst = arith.constant dense<0.000000e+00> : vector<8x64xf32>
    %2 = tpu.matmul %0, %1, %cst {dimension_numbers = #tpu.dot_dimension_numbers<[1], [0], [0], [1], [0, 0, 1, 1], [], []>} : vector<8x16xf32>, vector<16x64xf32>, vector<8x64xf32> -> vector<8x64xf32>
    %c0_3 = arith.constant 0 : index
    %3 = memref.load %arg4[%c0_3] : memref<1xf32, #tpu.memory_space<smem>>
    %4 = vector.broadcast %3 : f32 to vector<8x64xf32>
    %5 = arith.addf %2, %4 : vector<8x64xf32>
    %c0_4 = arith.constant 0 : index
    %c0_5 = arith.constant 0 : index
    %6 = vector.load %arg5[%c0_4, %c0_5] : memref<8x64xf32, #tpu.memory_space<vmem>>, vector<8x64xf32>
    tpu.vector_store %arg5[%c0_4, %c0_5], %5 {strides = array<i32>} : memref<8x64xf32, #tpu.memory_space<vmem>>, vector<8x64xf32>,
    return
  }
  func.func @transform_0(%arg0: i32, %arg1: i32) -> (i32, i32) {
    %c0_i32 = arith.constant 0 : i32
    return %arg0, %arg1 : i32, i32
  }
  func.func @transform_1(%arg0: i32, %arg1: i32) -> (i32, i32) {
    %c0_i32 = arith.constant 0 : i32
    %c0_i32_0 = arith.constant 0 : i32
    %c0_i32_1 = arith.constant 0 : i32
    return %c0_i32, %c0_i32_0 : i32, i32
  }
  func.func @transform_2(%arg0: i32, %arg1: i32) -> i32 {
    %c0_i32 = arith.constant 0 : i32
    %c0_i32_0 = arith.constant 0 : i32
    return %c0_i32 : i32
  }
  func.func @transform_3(%arg0: i32, %arg1: i32) -> (i32, i32) {
    %c0_i32 = arith.constant 0 : i32
    return %arg0, %arg1 : i32, i32
  }
}

</mosaic_0001>

<llo_original>
// kernel: tpu_custom_call.1
$region0: #{tpu_custom_call.1}
  #allocation0 [shape = 'u32[]', space=smem, size = 0x4, offset = 0x4, fixed_abs, tag = 'smem constant byte address 0x4 - core index']
  #allocation1 [shape = 'u32[144,128]{1,0:T(1,128)}', space=vmem, size = 0x12000, scoped, tag = 'internal scratch']
  #allocation2 [shape = 'f32[1]{0:T(128)S(6)}', space=smem, size = 0x200, scoped, tag = 'scoped memory for tpu_custom_call.1']
  %s0 = inlined_call_operand.hbm [shape: f32[8,16], index: 0, kind: input, shape index: {}]
  %s1 = inlined_call_operand.hbm [shape: f32[16,64], index: 1, kind: input, shape index: {}]
  %s2 = inlined_call_operand.<no memory space> [shape: f32[1], index: 2, kind: input, shape index: {}]
  %s3 = inlined_call_operand.hbm [shape: f32[8,64], index: 3, kind: output, shape index: {}]
  %s4 = sld [smem:[#allocation0]]
  $region30: #{tpu_custom_call.1} parent=0
    _
  %s6 = ssub.s32 1, %s4
  %s7 = scalar_select 0, %s6, %s4
  %8 = sst [smem:[#allocation2]] %s2
  $region1: #{tpu_custom_call.1} parent=0
    #allocation3 [shape = 'u8[4096]{0}', space=vmem, size = 0x1000, scoped, tag = 'input window, operand 0, single buffered']
    #allocation4 [shape = 's32[1]{0}', space=sflag, size = 0x4, scoped, tag = 'scoped memory for tpu_custom_call.1']
    #allocation5 [shape = 's32[1]{0}', space=sflag, size = 0x4, scoped, tag = 'scoped memory for tpu_custom_call.1']
    #allocation6 [shape = 'u8[8192]{0}', space=vmem, size = 0x2000, scoped, tag = 'input window, operand 1, single buffered']
    #allocation7 [shape = 's32[1]{0}', space=sflag, size = 0x4, scoped, tag = 'scoped memory for tpu_custom_call.1']
    #allocation8 [shape = 'u8[4096]{0}', space=vmem, size = 0x1000, scoped, tag = 'output window, operand 0, single buffered']
    %9 = vsyncpa [#allocation4], 0
    %10 = vsyncpa [#allocation7], 0
    %11 = vsyncpa [#allocation5], 0
    // Predicated region
    $region2: #{tpu_custom_call.1} parent=1 // pred_check
      _
    $region3: #{tpu_custom_call.1} parent=1 // pred_check_branch
      %13 = sbr.rel (0) target = $region5
    $region4: #{tpu_custom_call.1} parent=1 // pred_region
      %s15 = ssub.s32 128, 128
      %16 = vsyncadd [#allocation4], %s15
      %s18 = sshll.u32 [#allocation3], 4
      %s19 = int_to_ptr.vmem [resolvable:$true] %s18
      %21 = dma.hbm_to_vmem [thread:$0]  %s0, 128, %s19, [#allocation4]
    $region5: #{tpu_custom_call.1} parent=1 // pred_fallthru
      _
    // Predicated region
    $region6: #{tpu_custom_call.1} parent=1 // pred_check
      _
    $region7: #{tpu_custom_call.1} parent=1 // pred_check_branch
      %23 = sbr.rel (0) target = $region9
    $region8: #{tpu_custom_call.1} parent=1 // pred_region
      %s25 = ssub.s32 256, 256
      %26 = vsyncadd [#allocation7], %s25
      %s27 = sshll.u32 [#allocation6], 4
      %s28 = int_to_ptr.vmem [resolvable:$true] %s27
      %33 = dma.hbm_to_vmem [thread:$0]  %s1, 256, %s28, [#allocation7], 128, 128, 8
    $region9: #{tpu_custom_call.1} parent=1 // pred_fallthru
      _
    // Predicated region
    $region10: #{tpu_custom_call.1} parent=1 // pred_check
      _
    $region11: #{tpu_custom_call.1} parent=1 // pred_check_branch
      %35 = sbr.rel (0) target = $region13
    $region12: #{tpu_custom_call.1} parent=1 // pred_region
      _
    $region13: #{tpu_custom_call.1} parent=1 // pred_fallthru
      _
    // Predicated region
    $region14: #{tpu_custom_call.1} parent=1 // pred_check
      _
    $region15: #{tpu_custom_call.1} parent=1 // pred_check_branch
      %37 = sbr.rel (0) target = $region17
    $region16: #{tpu_custom_call.1} parent=1 // pred_region
      %38 = dma.done [#allocation4], 128
    $region17: #{tpu_custom_call.1} parent=1 // pred_fallthru
      _
    // Predicated region
    $region18: #{tpu_custom_call.1} parent=1 // pred_check
      _
    $region19: #{tpu_custom_call.1} parent=1 // pred_check_branch
      %40 = sbr.rel (0) target = $region21
    $region20: #{tpu_custom_call.1} parent=1 // pred_region
      %41 = dma.done [#allocation7], 256
    $region21: #{tpu_custom_call.1} parent=1 // pred_fallthru
      _
    %v42 = vld [vmem:[#allocation3] sm:$0xff]
    %v43 = vld [vmem:[#allocation6] sm:$0xff]
    %v44 = vld [vmem:[#allocation6 + $0x8] sm:$0xff]
    %s45 = sld [smem:[#allocation2]]
    %v46 = vstv %s45
    %vm47 = vcmask 130048
    %v49 = vsel %vm47, %v42, 0
    %51 = vmatprep.subr.mxu0 0.0
    %52 = vmatpush1.msra.mxu0 %v43
    %53 = vmatprep.subr.mxu0 0.0
    %54 = vmatpush1.msra.mxu0 %v44
    %55 = vmatprep.subr.mxu0 0.0
    %56 = vmatpush1.msra.mxu0 0.0
    %57 = vmatprep.subr.mxu0 0.0
    %58 = vmatpush1.msra.mxu0 0.0
    %59 = vmatprep.subr.mxu0 0.0
    %60 = vmatpush1.msra.mxu0 0.0
    %61 = vmatprep.subr.mxu0 0.0
    %62 = vmatpush1.msra.mxu0 0.0
    %63 = vmatprep.subr.mxu0 0.0
    %64 = vmatpush1.msra.mxu0 0.0
    %65 = vmatprep.subr.mxu0 0.0
    %66 = vmatpush1.msra.mxu0 0.0
    %67 = vmatprep.subr.mxu0 0.0
    %68 = vmatpush1.msra.mxu0 0.0
    %69 = vmatprep.subr.mxu0 0.0
    %70 = vmatpush1.msra.mxu0 0.0
    %71 = vmatprep.subr.mxu0 0.0
    %72 = vmatpush1.msra.mxu0 0.0
    %73 = vmatprep.subr.mxu0 0.0
    %74 = vmatpush1.msra.mxu0 0.0
    %75 = vmatprep.subr.mxu0 0.0
    %76 = vmatpush1.msra.mxu0 0.0
    %77 = vmatprep.subr.mxu0 0.0
    %78 = vmatpush1.msra.mxu0 0.0
    %79 = vmatprep.subr.mxu0 0.0
    %80 = vmatpush1.msra.mxu0 0.0
    %81 = vmatprep.subr.mxu0 0.0
    %82 = vmatpush1.msra.mxu0 0.0
    %83 = vmatprep.subr.mxu0 0.0
    %84 = vmatpush1.msra.mxu0 0.0
    %85 = vmatprep.subr.mxu0 0.0
    %86 = vmatpush1.msra.mxu0 0.0
    %87 = vmatprep.subr.mxu0 0.0
    %88 = vmatpush1.msra.mxu0 0.0
    %89 = vmatprep.subr.mxu0 0.0
    %90 = vmatpush1.msra.mxu0 0.0
    %91 = vmatprep.subr.mxu0 0.0
    %92 = vmatpush1.msra.mxu0 0.0
    %93 = vmatprep.subr.mxu0 0.0
    %94 = vmatpush1.msra.mxu0 0.0
    %95 = vmatprep.subr.mxu0 0.0
    %96 = vmatpush1.msra.mxu0 0.0
    %97 = vmatprep.subr.mxu0 0.0
    %98 = vmatpush1.msra.mxu0 0.0
    %99 = vmatprep.subr.mxu0 0.0
    %100 = vmatpush1.msra.mxu0 0.0
    %101 = vmatprep.subr.mxu0 0.0
    %102 = vmatpush1.msra.mxu0 0.0
    %103 = vmatprep.subr.mxu0 0.0
    %104 = vmatpush1.msra.mxu0 0.0
    %105 = vmatprep.subr.mxu0 0.0
    %106 = vmatpush1.msra.mxu0 0.0
    %107 = vmatprep.subr.mxu0 0.0
    %108 = vmatpush1.msra.mxu0 0.0
    %109 = vmatprep.subr.mxu0 0.0
    %110 = vmatpush1.msra.mxu0 0.0
    %111 = vmatprep.subr.mxu0 0.0
    %112 = vmatpush1.msra.mxu0 0.0
    %113 = vmatprep.subr.mxu0 0.0
    %114 = vmatpush1.msra.mxu0 0.0
    %115 = vmatprep.mubr.f32.mxu0 0.0
    %116 = vmatmul.mubr.f32.gmra.mrb[0].mxu0 %v49
    %v117 = vpop.f32.mrb[0].mxu0
    %v118 = vadd.f32 %v46, %v117
    %v119 = vpop.f32.mrb[0].mxu0
    %120 = vdwg.mxu0
    %vm121 = vcmask 523264
    %122 = vst.msk [vmem:[#allocation8] sm:$0xff] %vm121, %v118
    // Predicated region
    $region22: #{tpu_custom_call.1} parent=1 // pred_check
      _
    $region23: #{tpu_custom_call.1} parent=1 // pred_check_branch
      %124 = sbr.rel (0) target = $region25
    $region24: #{tpu_custom_call.1} parent=1 // pred_region
      %s126 = ssub.s32 128, 128
      %127 = vsyncadd [#allocation5], %s126
      %s129 = sshll.u32 [#allocation8], 4
      %s130 = int_to_ptr.vmem [resolvable:$true] %s129
      %132 = dma.vmem_to_hbm [thread:$0]  %s130, 128, %s3, [#allocation5]
    $region25: #{tpu_custom_call.1} parent=1 // pred_fallthru
      _
    // Predicated region
    $region26: #{tpu_custom_call.1} parent=1 // pred_check
      _
    $region27: #{tpu_custom_call.1} parent=1 // pred_check_branch
      %134 = sbr.rel (0) target = $region29
    $region28: #{tpu_custom_call.1} parent=1 // pred_region
      %135 = dma.done [#allocation5], 128
    $region29: #{tpu_custom_call.1} parent=1 // pred_fallthru
      _
    %136 = vsyncpa [#allocation4], 1
    %137 = vsyncpa [#allocation7], 1
    %138 = vsyncpa [#allocation5], 1

</llo_original>
